<compile_context>
chip_gen: v6e
topology: v6e:2x2x1
jax: 0.10.0
libtpu: 0.0.40
codegen_flags: <defaults>
</compile_context>

<pallas_src>
import jax
import jax.numpy as jnp
import numpy as np
from jax.experimental import pallas as pl
from jax.experimental.pallas import tpu as pltpu


def _round_up(x, m):
    return ((x + m - 1) // m) * m


# ----------------------------------------------------------------------------------
# Fused kernel: 1x1x1 Conv (as matmul) + folded BatchNorm + ReLU
# ----------------------------------------------------------------------------------
def _conv1x1_bn_relu_kernel(x_ref, w_ref, t_ref, o_ref):
    # x_ref: (Cin, TS) caller dtype   w_ref: (Cout, Cin) bf16 (BN scale pre-folded)
    # t_ref: (Cout, 1) f32            o_ref: (Cout, TS) bf16
    x = x_ref[...].astype(w_ref.dtype)            # cast on VPU -> no extra HBM pass
    y = jnp.dot(w_ref[...], x, preferred_element_type=jnp.float32)
    y = y + t_ref[...]                            # folded BN shift (f32 epilogue)
    o_ref[...] = jnp.maximum(y, 0.0).astype(o_ref.dtype)


def conv1x1_bn_relu(x_ncs, w_scaled, shift, *, ts=None,
                    vmem_tile_budget_bytes=20 << 20, out_dtype=jnp.bfloat16,
                    min_grid_steps=4):
    """x_ncs: (N, Cin, S); w_scaled: (Cout, Cin); shift: (Cout, 1) -> (N, Cout, S)."""
    N, Cin, S = x_ncs.shape
    Cout = w_scaled.shape[0]
    x_bytes = jnp.dtype(x_ncs.dtype).itemsize
    o_bytes = jnp.dtype(out_dtype).itemsize

    # Double-buffered VMEM bytes per spatial column (input tile + output tile).
    per_col = 2 * (Cin * x_bytes + Cout * o_bytes)
    if ts is None:
        # e.g. Cin=16 (f32) / Cout=128 (bf16): 20 MiB / 640 B -> TS = 32768.
        ts = max(128, (vmem_tile_budget_bytes // per_col) // 128 * 128)
    TS = min(_round_up(ts, 128), _round_up(S, 128))
    # Keep at least `min_grid_steps` grid steps so megacore sharding / pipelining
    # still have parallel work after enlarging TS (matters most on v7x: 2 TCs/chip).
    if N * pl.cdiv(S, TS) < min_grid_steps:
        blocks_per_n = pl.cdiv(min_grid_steps, N)
        TS = min(TS, max(128, _round_up(pl.cdiv(S, blocks_per_n), 128)))
    grid = (N, pl.cdiv(S, TS))

    # Scoped-VMEM request: double-buffered tiles + (tiny) weight/shift + headroom.
    footprint = TS * per_col + 4 * (Cout * Cin * 2 + Cout * 4)
    vmem_limit = max(16 << 20, int(footprint) + (4 << 20))

    cost = pl.CostEstimate(
        flops=2 * N * Cout * Cin * S,
        transcendentals=0,
        bytes_accessed=N * S * (Cin * x_bytes + Cout * o_bytes)
                       + Cout * Cin * 2 + Cout * 4,
    )

    return pl.pallas_call(
        _conv1x1_bn_relu_kernel,
        out_shape=jax.ShapeDtypeStruct((N, Cout, S), out_dtype),
        grid=grid,
        in_specs=[
            pl.BlockSpec((None, Cin, TS), lambda n, s: (n, 0, s)),   # activations
            pl.BlockSpec((Cout, Cin), lambda n, s: (0, 0)),          # folded weight (resident)
            pl.BlockSpec((Cout, 1), lambda n, s: (0, 0)),            # BN shift
        ],
        out_specs=pl.BlockSpec((None, Cout, TS), lambda n, s: (n, 0, s)),
        compiler_params=pltpu.CompilerParams(
            dimension_semantics=("parallel", "parallel"),
            vmem_limit_bytes=vmem_limit),
        cost_estimate=cost,
    )(x_ncs, w_scaled, shift)


# ----------------------------------------------------------------------------------
# Exact JAX port of models.pixel_shuffle for 5-D NCDHW input (single XLA transpose).
# The kernel output reshaped to (N, C2, r, r, r, D, H, W) is free; this permute is the
# only extra HBM pass left on the output path.
# ----------------------------------------------------------------------------------
def pixel_shuffle_3d(x, r):
    N, C, D, H, W = x.shape
    C2 = C // (r ** 3)
    v = x.reshape(N, C2, r, r, r, D, H, W)
    # torch: indicies = [2..7]; indicies = [3,5,7]+[2,4,6]; permute(0,1,*indicies[::-1])
    v = jnp.transpose(v, (0, 1, 6, 4, 2, 7, 5, 3))
    return v.reshape(N, C2, r * D, r * H, r * W)


# ----------------------------------------------------------------------------------
# Module forward
# ----------------------------------------------------------------------------------
def pixel_shuffle_icnr_3d_forward(fused, x_ncdhw, *, scale=2, ts=None, do_blur=False):
    """x: (N, ni, D, H, W) NCDHW -> (N, nf, scale*D, scale*H, scale*W)."""
    if do_blur:
        # TODO(synk): blur path (ReplicationPad3d + AvgPool3d(2,1)) not implemented.
        raise NotImplementedError("do_blur=True path not implemented")
    N, Cin, D, H, W = x_ncdhw.shape
    S = D * H * W
    y = conv1x1_bn_relu(x_ncdhw.reshape(N, Cin, S),
                        fused['w_scaled'], fused['shift'], ts=ts)
    Cout = y.shape[1]
    y = y.reshape(N, Cout, D, H, W)
    return pixel_shuffle_3d(y, scale)


# ----------------------------------------------------------------------------------
# Deterministic parameter init + BN folding
# ----------------------------------------------------------------------------------
def init_params(key, ni, nf=None, scale=2, eps=1e-5, compute_dtype=jnp.bfloat16):
    nf = ni if nf is None else nf
    Cout = nf * scale ** 3
    k1, k2, k3, k4, k5 = jax.random.split(key, 5)
    raw = {
        'w': 0.1 * jax.random.normal(k1, (Cout, ni), jnp.float32),    # Conv3d k=1 weight, squeezed
        'g': jax.random.uniform(k2, (Cout,), jnp.float32, 0.5, 1.5),  # BN gamma
        'b': 0.1 * jax.random.normal(k3, (Cout,), jnp.float32),       # BN beta
        'm': 0.1 * jax.random.normal(k4, (Cout,), jnp.float32),       # BN running mean
        'v': jax.random.uniform(k5, (Cout,), jnp.float32, 0.5, 1.5),  # BN running var
    }
    s = raw['g'] / jnp.sqrt(raw['v'] + eps)        # per-channel BN scale
    t = raw['b'] - raw['m'] * s                    # per-channel BN shift (conv has no bias)
    fused = {
        'w_scaled': (raw['w'] * s[:, None]).astype(compute_dtype),    # scale folded into weight
        'shift': t.reshape(Cout, 1).astype(jnp.float32),              # shift kept in f32
    }
    return raw, fused


# ----------------------------------------------------------------------------------
# Pure-JAX f32 reference (eval-mode semantics) for sanity checking
# ----------------------------------------------------------------------------------
def reference_forward(raw, x_ncdhw, scale=2, eps=1e-5):
    y = jnp.einsum('oc,ncdhw->nodhw', raw['w'], x_ncdhw,
                   precision=jax.lax.Precision.HIGHEST)
    s = raw['g'] / jnp.sqrt(raw['v'] + eps)
    t = raw['b'] - raw['m'] * s
    y = y * s[None, :, None, None, None] + t[None, :, None, None, None]
    y = jnp.maximum(y, 0.0)
    return pixel_shuffle_3d(y, scale)


if __name__ == "__main__":
    ni, nf, scale = 16, 16, 2            # Cout = nf * 8 = 128
    N, D, H, W = 2, 8, 8, 8

    key = jax.random.PRNGKey(0)
    kx, kp = jax.random.split(key)
    x = jax.random.normal(kx, (N, ni, D, H, W), jnp.float32)
    raw, fused = init_params(kp, ni, nf, scale)
    ref = reference_forward(raw, x, scale)

    # 1) default auto-sized tiling (min-grid-steps heuristic kicks in at this tiny S)
    fwd_auto = jax.jit(lambda p, xx: pixel_shuffle_icnr_3d_forward(p, xx, scale=scale))
    out = jax.block_until_ready(fwd_auto(fused, x))
    assert out.shape == (N, nf, scale * D, scale * H, scale * W), out.shape
    np.testing.assert_allclose(np.asarray(out, np.float32), np.asarray(ref),
                               rtol=2e-2, atol=2e-2)

    # 2) small explicit tile to exercise a multi-block spatial grid
    fwd_tiled = jax.jit(lambda p, xx: pixel_shuffle_icnr_3d_forward(p, xx, scale=scale, ts=128))
    out2 = jax.block_until_ready(fwd_tiled(fused, x))
    np.testing.assert_allclose(np.asarray(out2, np.float32), np.asarray(ref),
                               rtol=2e-2, atol=2e-2)

    print("KERNEL_OK")
</pallas_src>

<mosaic_0001>
module attributes {stable_mosaic.version = 11 : i64} {
  func.func @_conv1x1_bn_relu_kernel(%arg0: i32, %arg1: i32, %arg2: memref<1x16x256xf32, #tpu.memory_space<vmem>>, %arg3: memref<128x16xbf16, #tpu.memory_space<vmem>>, %arg4: memref<128x1xf32, #tpu.memory_space<vmem>>, %arg5: memref<1x128x256xbf16, #tpu.memory_space<vmem>>) attributes {dimension_semantics = [#tpu.dimension_semantics<parallel>, #tpu.dimension_semantics<parallel>], iteration_bounds = array<i64: 2, 2>, scalar_prefetch = 0 : i64, scratch_operands = 0 : i64, tpu.core_type = #tpu.core_type<tc>, window_params = [{transform_indices = @transform_0, window_bounds = array<i64: 1, 16, 256>}, {pipeline_mode = #tpu.pipeline_mode<synchronous>, transform_indices = @transform_1, window_bounds = array<i64: 128, 16>}, {pipeline_mode = #tpu.pipeline_mode<synchronous>, transform_indices = @transform_2, window_bounds = array<i64: 128, 1>}, {transform_indices = @transform_3, window_bounds = array<i64: 1, 128, 256>}]} {
    %c0 = arith.constant 0 : index
    %c0_0 = arith.constant 0 : index
    %c0_1 = arith.constant 0 : index
    %0 = vector.load %arg2[%c0, %c0_0, %c0_1] : memref<1x16x256xf32, #tpu.memory_space<vmem>>, vector<1x16x256xf32>
    %1 = vector.shape_cast %0 : vector<1x16x256xf32> to vector<16x256xf32>
    %2 = arith.truncf %1 : vector<16x256xf32> to vector<16x256xbf16>
    %c0_2 = arith.constant 0 : index
    %c0_3 = arith.constant 0 : index
    %3 = vector.load %arg3[%c0_2, %c0_3] : memref<128x16xbf16, #tpu.memory_space<vmem>>, vector<128x16xbf16>
    %cst = arith.constant dense<0.000000e+00> : vector<128x256xf32>
    %4 = tpu.matmul %3, %2, %cst {dimension_numbers = #tpu.dot_dimension_numbers<[1], [0], [0], [1], [0, 0, 1, 1], [], []>} : vector<128x16xbf16>, vector<16x256xbf16>, vector<128x256xf32> -> vector<128x256xf32>
    %c0_4 = arith.constant 0 : index
    %c0_5 = arith.constant 0 : index
    %5 = vector.load %arg4[%c0_4, %c0_5] : memref<128x1xf32, #tpu.memory_space<vmem>>, vector<128x1xf32>
    %6 = vector.broadcast %5 : vector<128x1xf32> to vector<128x256xf32>
    %7 = arith.addf %4, %6 : vector<128x256xf32>
    %cst_6 = arith.constant 0.000000e+00 : f32
    %8 = vector.broadcast %cst_6 : f32 to vector<128x256xf32>
    %9 = arith.maximumf %7, %8 : vector<128x256xf32>
    %10 = arith.truncf %9 : vector<128x256xf32> to vector<128x256xbf16>
    %c0_7 = arith.constant 0 : index
    %c0_8 = arith.constant 0 : index
    %c0_9 = arith.constant 0 : index
    %11 = vector.load %arg5[%c0_7, %c0_8, %c0_9] : memref<1x128x256xbf16, #tpu.memory_space<vmem>>, vector<1x128x256xbf16>
    %12 = vector.shape_cast %11 : vector<1x128x256xbf16> to vector<128x256xbf16>
    %13 = vector.shape_cast %10 : vector<128x256xbf16> to vector<1x128x256xbf16>
    tpu.vector_store %arg5[%c0_7, %c0_8, %c0_9], %13 {strides = array<i32>} : memref<1x128x256xbf16, #tpu.memory_space<vmem>>, vector<1x128x256xbf16>,
    return
  }
  func.func @transform_0(%arg0: i32, %arg1: i32) -> (i32, i32, i32) {
    %c0_i32 = arith.constant 0 : i32
    %c0_i32_0 = arith.constant 0 : i32
    return %arg0, %c0_i32, %arg1 : i32, i32, i32
  }
  func.func @transform_1(%arg0: i32, %arg1: i32) -> (i32, i32) {
    %c0_i32 = arith.constant 0 : i32
    %c0_i32_0 = arith.constant 0 : i32
    %c0_i32_1 = arith.constant 0 : i32
    return %c0_i32, %c0_i32_0 : i32, i32
  }
  func.func @transform_2(%arg0: i32, %arg1: i32) -> (i32, i32) {
    %c0_i32 = arith.constant 0 : i32
    %c0_i32_0 = arith.constant 0 : i32
    %c0_i32_1 = arith.constant 0 : i32
    return %c0_i32, %c0_i32_0 : i32, i32
  }
  func.func @transform_3(%arg0: i32, %arg1: i32) -> (i32, i32, i32) {
    %c0_i32 = arith.constant 0 : i32
    %c0_i32_0 = arith.constant 0 : i32
    return %arg0, %c0_i32, %arg1 : i32, i32, i32
  }
}

</mosaic_0001>

<llo_original>
// kernel: _lambda_.1
$region0: #{_lambda_.1}
  #allocation0 [shape = 'u32[]', space=smem, size = 0x4, offset = 0x4, fixed_abs, tag = 'smem constant byte address 0x4 - core index']
  #allocation1 [shape = 'u32[144,128]{1,0:T(1,128)}', space=vmem, size = 0x12000, scoped, tag = 'internal scratch']
  %s0 = inlined_call_operand.vmem [shape: f32[2,16,512], index: 0, kind: input, shape index: {}]
  %s1 = inlined_call_operand.vmem [shape: bf16[128,16], index: 1, kind: input, shape index: {}]
  %s2 = inlined_call_operand.vmem [shape: f32[128,1], index: 2, kind: input, shape index: {}]
  %s3 = inlined_call_operand.vmem [shape: bf16[2,128,512], index: 3, kind: output, shape index: {}]
  %s4 = sld [smem:[#allocation0]]
  $region102: #{_lambda_.1} parent=0
    _
  %s6 = ssub.s32 1, %s4
  %s7 = scalar_select 0, %s6, %s4
  $region1: #{_lambda_.1} parent=0
    #allocation2 [shape = 'u8[32768]{0}', space=vmem, size = 0x8000, scoped, tag = 'input window, operand 0']
    #allocation3 [shape = 'u8[131072]{0}', space=vmem, size = 0x20000, scoped, tag = 'output window, operand 0']
    loop: start=0, step=1, limit=6
    $region2: #{_lambda_.1} parent=1 // loop_pre_header
      _
    $region3: #{_lambda_.1} parent=1 // loop_header
      %s9 = sphi 0, %s13
      %p10 = scmp.ge.s32.totalorder %s9, 6
      %s16 = sphi 0, %s28
      %s17 = sphi 0, %s24
      %s18 = sphi 0, %s16
      %s19 = sphi 0, %s17
      %s20 = sphi 0, %s18
      %s21 = sphi 0, %s19
      %s33 = sphi 0, %s35
      %s36 = sphi 0, %s33
      %s37 = sphi 0, %s36
      %s53 = sphi 0, %s37
      %s57 = sphi 0, %s57
      %s59 = sphi 0, %s57
      %s60 = sphi 0, %s59
      %s74 = sphi 0, %s60
      %s78 = sphi 0, %s78
      %s80 = sphi 0, %s78
      %s81 = sphi 0, %s80
      %s95 = sphi 0, %s81
      %s103 = sphi 0, %s105
      %s106 = sphi 0, %s103
      %s107 = sphi 0, %s106
      %s123 = sphi 0, %s107
    $region4: #{_lambda_.1} parent=1 // loop_header_branch
      %12 = sbr.rel (%p10) target = $region8
    $region5: #{_lambda_.1} parent=1 // loop_body
      %s14 = ssub.s32 %s9, 1
      %s15 = ssub.s32 %s9, 2
      %s22 = sadd.s32 1, %s17
      %p23 = scmp.ge.s32.totalorder %s22, 2
      %s24 = scalar_select %p23, 0, %s22
      %s25 = sadd.s32 1, %s16
      %s26 = scalar_select %p23, %s25, %s16
      %p27 = scmp.ge.s32.totalorder %s26, 2
      %s28 = scalar_select %p27, 0, %s26
      %s29 = ssub.s32 %s16, %s28
      %s30 = ssub.s32 %s17, %s24
      %s31 = sor.u32 %s29, %s30
      %p32 = scmp.eq.s32.totalorder %s31, 0
      %s34 = sadd.s32 %s33, 1
      %s35 = scalar_select %p32, %s33, %s34
      %p38 = pneg %p32
      %p39 = scmp.eq.s32.totalorder %s9, 3
      %p40 = por %p38, %p39
      %p41 = scmp.ne.s32.totalorder %s33, %s36
      %p42 = scmp.eq.s32.totalorder %s9, 0
      %p43 = por %p41, %p42
      %p44 = scmp.ne.s32.totalorder %s33, %s36
      %p45 = scmp.eq.s32.totalorder %s14, 3
      %p46 = por %p44, %p45
      %p47 = scmp.ne.s32.totalorder %s36, %s37
      %p48 = scmp.eq.s32.totalorder %s14, 0
      %p49 = por %p47, %p48
      %p50 = scmp.ne.s32.totalorder %s36, %s37
      %p51 = scmp.eq.s32.totalorder %s15, 3
      %p52 = por %p50, %p51
      %p54 = scmp.ne.s32.totalorder %s37, %s53
      %p55 = scmp.eq.s32.totalorder %s15, 0
      %p56 = por %p54, %p55
      %s58 = sadd.s32 %s57, 1
      %p61 = scmp.eq.s32.totalorder %s9, 3
      %p62 = scmp.ne.s32.totalorder %s57, %s59
      %p63 = scmp.eq.s32.totalorder %s9, 0
      %p64 = por %p62, %p63
      %p65 = scmp.ne.s32.totalorder %s57, %s59
      %p66 = scmp.eq.s32.totalorder %s14, 3
      %p67 = por %p65, %p66
      %p68 = scmp.ne.s32.totalorder %s59, %s60
      %p69 = scmp.eq.s32.totalorder %s14, 0
      %p70 = por %p68, %p69
      %p71 = scmp.ne.s32.totalorder %s59, %s60
      %p72 = scmp.eq.s32.totalorder %s15, 3
      %p73 = por %p71, %p72
      %p75 = scmp.ne.s32.totalorder %s60, %s74
      %p76 = scmp.eq.s32.totalorder %s15, 0
      %p77 = por %p75, %p76
      %s79 = sadd.s32 %s78, 1
      %p82 = scmp.eq.s32.totalorder %s9, 3
      %p83 = scmp.ne.s32.totalorder %s78, %s80
      %p84 = scmp.eq.s32.totalorder %s9, 0
      %p85 = por %p83, %p84
      %p86 = scmp.ne.s32.totalorder %s78, %s80
      %p87 = scmp.eq.s32.totalorder %s14, 3
      %p88 = por %p86, %p87
      %p89 = scmp.ne.s32.totalorder %s80, %s81
      %p90 = scmp.eq.s32.totalorder %s14, 0
      %p91 = por %p89, %p90
      %p92 = scmp.ne.s32.totalorder %s80, %s81
      %p93 = scmp.eq.s32.totalorder %s15, 3
      %p94 = por %p92, %p93
      %p96 = scmp.ne.s32.totalorder %s81, %s95
      %p97 = scmp.eq.s32.totalorder %s15, 0
      %p98 = por %p96, %p97
      %s99 = ssub.s32 %s16, %s28
      %s100 = ssub.s32 %s17, %s24
      %s101 = sor.u32 %s99, %s100
      %p102 = scmp.eq.s32.totalorder %s101, 0
      %s104 = sadd.s32 %s103, 1
      %s105 = scalar_select %p102, %s103, %s104
      %p108 = pneg %p102
      %p109 = scmp.eq.s32.totalorder %s9, 3
      %p110 = por %p108, %p109
      %p111 = scmp.ne.s32.totalorder %s103, %s106
      %p112 = scmp.eq.s32.totalorder %s9, 0
      %p113 = por %p111, %p112
      %p114 = scmp.ne.s32.totalorder %s103, %s106
      %p115 = scmp.eq.s32.totalorder %s14, 3
      %p116 = por %p114, %p115
      %p117 = scmp.ne.s32.totalorder %s106, %s107
      %p118 = scmp.eq.s32.totalorder %s14, 0
      %p119 = por %p117, %p118
      %p120 = scmp.ne.s32.totalorder %s106, %s107
      %p121 = scmp.eq.s32.totalorder %s15, 3
      %p122 = por %p120, %p121
      %p124 = scmp.ne.s32.totalorder %s107, %s123
      %p125 = scmp.eq.s32.totalorder %s15, 0
      %p126 = por %p124, %p125
      %p127 = scmp.le.s32.totalorder 1, %s9
      %p128 = scmp.lt.s32.totalorder %s9, 5
      %p129 = pnand %p127, %p128
      %p130 = pneg %p129
      // Predicated region
      $region9: #{_lambda_.1} parent=5 // pred_check
        _
      $region10: #{_lambda_.1} parent=5 // pred_check_branch
        %132 = sbr.rel (%p129) target = $region12
      $region11: #{_lambda_.1} parent=5 // pred_region
        %s133 = ssub.s32 %s9, 1
        // Predicated region
        $region13: #{_lambda_.1} parent=11 // pred_check
          %p134 = pneg %p70
        $region14: #{_lambda_.1} parent=11 // pred_check_branch
          %136 = sbr.rel (%p134) target = $region16
        $region15: #{_lambda_.1} parent=11 // pred_region
          _
        $region16: #{_lambda_.1} parent=11 // pred_fallthru
          _
        // Predicated region
        $region17: #{_lambda_.1} parent=11 // pred_check
          %p137 = pneg %p91
        $region18: #{_lambda_.1} parent=11 // pred_check_branch
          %139 = sbr.rel (%p137) target = $region20
        $region19: #{_lambda_.1} parent=11 // pred_region
          _
        $region20: #{_lambda_.1} parent=11 // pred_fallthru
          _
      $region12: #{_lambda_.1} parent=5 // pred_fallthru
        _
      %p140 = scmp.lt.s32.totalorder %s9, 4
      // Predicated region
      $region21: #{_lambda_.1} parent=5 // pred_check
        %p141 = pneg %p140
      $region22: #{_lambda_.1} parent=5 // pred_check_branch
        %143 = sbr.rel (%p141) target = $region24
      $region23: #{_lambda_.1} parent=5 // pred_region
        // Predicated region
        $region25: #{_lambda_.1} parent=23 // pred_check
          %p144 = pneg %p43
        $region26: #{_lambda_.1} parent=23 // pred_check_branch
          %146 = sbr.rel (%p144) target = $region28
        $region27: #{_lambda_.1} parent=23 // pred_region
          %s147 = sand.u32 %s33, 1
          %s148 = sand.u32 %s33, 1
          %s149 = smul.addr %s148, 32
          %s150 = scalar_lea.vmem [#allocation2], %s149
          %s151 = smul.u32 2, %s17
          %s152 = smul.addr %s16, 8
          %s153 = sadd.s32 %s151, %s152
          %s154 = smul.addr %s153, 8
          %s155 = scalar_lea.vmem %s0, %s154
          // Predicated region
          $region29: #{_lambda_.1} parent=27 // pred_check
            _
          $region30: #{_lambda_.1} parent=27 // pred_check_branch
            %157 = sbr.rel (0) target = $region32
          $region31: #{_lambda_.1} parent=27 // pred_region
            // Predicated region
            $region33: #{_lambda_.1} parent=31 // pred_check
              _
            $region34: #{_lambda_.1} parent=31 // pred_check_branch
              %159 = sbr.rel (0) target = $region36
            $region35: #{_lambda_.1} parent=31 // pred_region
              loop: start=0, step=1, limit=1
              $region37: #{_lambda_.1} parent=35 // loop_pre_header
                _
              $region38: #{_lambda_.1} parent=35 // loop_header
                %s161 = sphi 0, %s165
                %p162 = scmp.ge.s32.totalorder %s161, 1
                %s166 = sphi %s155, %s155
                %s167 = sphi %s150, %s150
              $region39: #{_lambda_.1} parent=35 // loop_header_branch
                %164 = sbr.rel (%p162) target = $region43
              $region40: #{_lambda_.1} parent=35 // loop_body
                %v168 = vld [vmem:[%s166] sm:$0xff]
                %169 = vst [vmem:[%s167] sm:$0xff] %v168
                %v170 = vld [vmem:[%s166 + $0x8] sm:$0xff]
                %171 = vst [vmem:[%s167 + $0x8] sm:$0xff] %v170
                %v172 = vld [vmem:[%s166 + $0x20] sm:$0xff]
                %173 = vst [vmem:[%s167 + $0x10] sm:$0xff] %v172
                %v174 = vld [vmem:[%s166 + $0x28] sm:$0xff]
                %175 = vst [vmem:[%s167 + $0x18] sm:$0xff] %v174
              $region41: #{_lambda_.1} parent=35 // loop_footer
                %s165 = sadd.s32 1, %s161
              $region42: #{_lambda_.1} parent=35 // loop_footer_branch
                %160 = sbr.rel target = $region38
              $region43: #{_lambda_.1} parent=35 // loop_exit
                _
            $region36: #{_lambda_.1} parent=31 // pred_fallthru
              _
            // Predicated region
            $region44: #{_lambda_.1} parent=31 // pred_check
              _
            $region45: #{_lambda_.1} parent=31 // pred_check_branch
              %177 = sbr.rel target = $region47
            $region46: #{_lambda_.1} parent=31 // pred_region
              _
            $region47: #{_lambda_.1} parent=31 // pred_fallthru
              _
          $region32: #{_lambda_.1} parent=27 // pred_fallthru
            _
          %178 = vnop
        $region28: #{_lambda_.1} parent=23 // pred_fallthru
          _
      $region24: #{_lambda_.1} parent=5 // pred_fallthru
        _
      %p179 = scmp.le.s32.totalorder 1, %s9
      %p180 = scmp.lt.s32.totalorder %s9, 5
      %p181 = pnand %p179, %p180
      %p182 = pneg %p181
      // Predicated region
      $region48: #{_lambda_.1} parent=5 // pred_check
        _
      $region49: #{_lambda_.1} parent=5 // pred_check_branch
        %184 = sbr.rel (%p181) target = $region51
      $region50: #{_lambda_.1} parent=5 // pred_region
        %s185 = ssub.s32 %s9, 1
        %s186 = sand.u32 %s36, 1
        %s187 = sand.u32 %s36, 1
        %s188 = smul.addr %s187, 32
        %s189 = scalar_lea.vmem [#allocation2], %s188
        // Predicated region
        $region52: #{_lambda_.1} parent=50 // pred_check
          %p190 = pneg %p49
        $region53: #{_lambda_.1} parent=50 // pred_check_branch
          %192 = sbr.rel (%p190) target = $region55
        $region54: #{_lambda_.1} parent=50 // pred_region
          _
        $region55: #{_lambda_.1} parent=50 // pred_fallthru
          _
        %s193 = sand.u32 %s36, 1
        %s194 = sand.u32 %s36, 1
        %s195 = smul.addr %s194, 32
        %s196 = scalar_lea.vmem [#allocation2], %s195
        %p197 = pneg %p49
        %p198 = pneg %p46
        %p199 = pneg %p70
        %p200 = pneg %p67
        %p201 = pneg %p91
        %p202 = pneg %p88
        %p203 = pneg %p119
        %p204 = pneg %p116
        %s205 = sand.u32 %s106, 1
        %s206 = sand.u32 %s106, 1
        %s207 = smul.addr %s206, 128
        %s208 = scalar_lea.vmem [#allocation3], %s207
        %s209 = smul.u32 2, %s19
        %s210 = smul.u32 2, %s19
        %v212 = vld [vmem:[%s189] sm:$0xff]
        %v213 = vld [vmem:[%s189 + $0x8] sm:$0xff]
        %v214 = vld [vmem:[%s189 + $0x10] sm:$0xff]
        %v215 = vld [vmem:[%s189 + $0x18] sm:$0xff]
        %v216 = vpack.c.bf16 %v214, %v212
        %v217 = vpack.c.bf16 %v215, %v213
        %v218 = vld [vmem:[%s1] sm:$0xf]
        %v219 = vld [vmem:[%s1 + $0x4] sm:$0xf]
        %v220 = vld [vmem:[%s1 + $0x8] sm:$0xf]
        %v221 = vld [vmem:[%s1 + $0xc] sm:$0xf]
        %v222 = vld [vmem:[%s1 + $0x10] sm:$0xf]
        %v223 = vld [vmem:[%s1 + $0x14] sm:$0xf]
        %v224 = vld [vmem:[%s1 + $0x18] sm:$0xf]
        %v225 = vld [vmem:[%s1 + $0x1c] sm:$0xf]
        %v226 = vld [vmem:[%s1 + $0x20] sm:$0xf]
        %v227 = vld [vmem:[%s1 + $0x24] sm:$0xf]
        %v228 = vld [vmem:[%s1 + $0x28] sm:$0xf]
        %v229 = vld [vmem:[%s1 + $0x2c] sm:$0xf]
        %v230 = vld [vmem:[%s1 + $0x30] sm:$0xf]
        %v231 = vld [vmem:[%s1 + $0x34] sm:$0xf]
        %v232 = vld [vmem:[%s1 + $0x38] sm:$0xf]
        %v233 = vld [vmem:[%s1 + $0x3c] sm:$0xf]
        %v234 = vld [vmem:[%s2] sm:$0xff]
        %v235 = vld [vmem:[%s2 + $0x8] sm:$0xff]
        %v236 = vld [vmem:[%s2 + $0x10] sm:$0xff]
        %v237 = vld [vmem:[%s2 + $0x18] sm:$0xff]
        %v238 = vld [vmem:[%s2 + $0x20] sm:$0xff]
        %v239 = vld [vmem:[%s2 + $0x28] sm:$0xff]
        %v240 = vld [vmem:[%s2 + $0x30] sm:$0xff]
        %v241 = vld [vmem:[%s2 + $0x38] sm:$0xff]
        %v242 = vld [vmem:[%s2 + $0x40] sm:$0xff]
        %v243 = vld [vmem:[%s2 + $0x48] sm:$0xff]
        %v244 = vld [vmem:[%s2 + $0x50] sm:$0xff]
        %v245 = vld [vmem:[%s2 + $0x58] sm:$0xff]
        %v246 = vld [vmem:[%s2 + $0x60] sm:$0xff]
        %v247 = vld [vmem:[%s2 + $0x68] sm:$0xff]
        %v248 = vld [vmem:[%s2 + $0x70] sm:$0xff]
        %v249 = vld [vmem:[%s2 + $0x78] sm:$0xff]
        %251 = vset.pattern.permute.xlu0 0
        %252 = vperm.xlu0 %251, %v234
        %v253 = vpop.permute.xlu0 %252
        %256 = vset.pattern.permute.xlu0 0
        %257 = vperm.xlu0 %256, %v235
        %v258 = vpop.permute.xlu0 %257
        %261 = vset.pattern.permute.xlu0 0
        %262 = vperm.xlu0 %261, %v236
        %v263 = vpop.permute.xlu0 %262
        %266 = vset.pattern.permute.xlu0 0
        %267 = vperm.xlu0 %266, %v237
        %v268 = vpop.permute.xlu0 %267
        %271 = vset.pattern.permute.xlu0 0
        %272 = vperm.xlu0 %271, %v238
        %v273 = vpop.permute.xlu0 %272
        %276 = vset.pattern.permute.xlu0 0
        %277 = vperm.xlu0 %276, %v239
        %v278 = vpop.permute.xlu0 %277
        %281 = vset.pattern.permute.xlu0 0
        %282 = vperm.xlu0 %281, %v240
        %v283 = vpop.permute.xlu0 %282
        %286 = vset.pattern.permute.xlu0 0
        %287 = vperm.xlu0 %286, %v241
        %v288 = vpop.permute.xlu0 %287
        %291 = vset.pattern.permute.xlu0 0
        %292 = vperm.xlu0 %291, %v242
        %v293 = vpop.permute.xlu0 %292
        %296 = vset.pattern.permute.xlu0 0
        %297 = vperm.xlu0 %296, %v243
        %v298 = vpop.permute.xlu0 %297
        %301 = vset.pattern.permute.xlu0 0
        %302 = vperm.xlu0 %301, %v244
        %v303 = vpop.permute.xlu0 %302
        %306 = vset.pattern.permute.xlu0 0
        %307 = vperm.xlu0 %306, %v245
        %v308 = vpop.permute.xlu0 %307
        %311 = vset.pattern.permute.xlu0 0
        %312 = vperm.xlu0 %311, %v246
        %v313 = vpop.permute.xlu0 %312
        %316 = vset.pattern.permute.xlu0 0
        %317 = vperm.xlu0 %316, %v247
        %v318 = vpop.permute.xlu0 %317
        %321 = vset.pattern.permute.xlu0 0
        %322 = vperm.xlu0 %321, %v248
        %v323 = vpop.permute.xlu0 %322
        %326 = vset.pattern.permute.xlu0 0
        %327 = vperm.xlu0 %326, %v249
        %v328 = vpop.permute.xlu0 %327
        %v346 = vunpack.c.l.b16 %v218
        %v347 = vunpack.c.l.b16 %v219
        %v348 = vunpack.c.l.b16 %v220
        %v349 = vunpack.c.l.b16 %v221
        %v350 = vunpack.c.l.b16 %v222
        %v351 = vunpack.c.l.b16 %v223
        %v352 = vunpack.c.l.b16 %v224
        %v353 = vunpack.c.l.b16 %v225
        %v354 = vunpack.c.l.b16 %v226
        %v355 = vunpack.c.l.b16 %v227
        %v356 = vunpack.c.l.b16 %v228
        %v357 = vunpack.c.l.b16 %v229
        %v358 = vunpack.c.l.b16 %v230
        %v359 = vunpack.c.l.b16 %v231
        %v360 = vunpack.c.l.b16 %v232
        %v361 = vunpack.c.l.b16 %v233
        %v362 = vpack.c.b16 %v347, %v346
        %v363 = vpack.c.b16 %v349, %v348
        %v364 = vpack.c.b16 %v351, %v350
        %v365 = vpack.c.b16 %v353, %v352
        %v366 = vpack.c.b16 %v355, %v354
        %v367 = vpack.c.b16 %v357, %v356
        %v368 = vpack.c.b16 %v359, %v358
        %v369 = vpack.c.b16 %v361, %v360
        %vm370 = vcmask 130048
        %v372 = vsel %vm370, %v362, 0
        %v375 = vsel %vm370, %v363, 0
        %v378 = vsel %vm370, %v364, 0
        %v381 = vsel %vm370, %v365, 0
        %v384 = vsel %vm370, %v366, 0
        %v387 = vsel %vm370, %v367, 0
        %v390 = vsel %vm370, %v368, 0
        %v393 = vsel %vm370, %v369, 0
        %395 = vmatprep.subr.bf16.mxu0 0
        %396 = vmatpush1.bf16.msra.mxu0 0
        %397 = vmatprep.subr.bf16.mxu0 0
        %398 = vmatpush1.bf16.msra.mxu0 0
        %399 = vmatprep.subr.bf16.mxu0 0
        %400 = vmatpush1.bf16.msra.mxu0 0
        %401 = vmatprep.subr.bf16.mxu0 0
        %402 = vmatpush1.bf16.msra.mxu0 0
        %403 = vmatprep.subr.bf16.mxu0 0
        %404 = vmatpush1.bf16.msra.mxu0 0
        %405 = vmatprep.subr.bf16.mxu0 0
        %406 = vmatpush1.bf16.msra.mxu0 0
        %407 = vmatprep.subr.bf16.mxu0 0
        %408 = vmatpush1.bf16.msra.mxu0 0
        %409 = vmatprep.subr.bf16.mxu0 %v217
        %410 = vmatpush1.bf16.msra.mxu0 %v216
        %411 = vmatprep.subr.bf16.mxu0 0
        %412 = vmatpush2.bf16.msra.mxu0 0
        %413 = vmatprep.subr.bf16.mxu0 0
        %414 = vmatpush2.bf16.msra.mxu0 0
        %415 = vmatprep.subr.bf16.mxu0 0
        %416 = vmatpush2.bf16.msra.mxu0 0
        %417 = vmatprep.subr.bf16.mxu0 0
        %418 = vmatpush2.bf16.msra.mxu0 0
        %419 = vmatprep.subr.bf16.mxu0 0
        %420 = vmatpush2.bf16.msra.mxu0 0
        %421 = vmatprep.subr.bf16.mxu0 0
        %422 = vmatpush2.bf16.msra.mxu0 0
        %423 = vmatprep.subr.bf16.mxu0 0
        %424 = vmatpush2.bf16.msra.mxu0 0
        %425 = vmatprep.subr.bf16.mxu0 0
        %426 = vmatpush2.bf16.msra.mxu0 0
        %427 = vmatprep.mubr.bf16.mxu0 0
        %428 = vmatmul.mubr.bf16.gmra.mxu0 %v372
        %v429 = vpop.f32.mrf.mxu0
        %v430 = vadd.f32 %v253, %v429
        %v431 = vpop.f32.mrf.mxu0
        %v432 = vadd.f32 %v253, %v431
        %v433 = vpop.f32.mrf.mxu0
        %v434 = vadd.f32 %v258, %v433
        %v435 = vpop.f32.mrf.mxu0
        %v436 = vadd.f32 %v258, %v435
        %437 = vmatprep.mubr.bf16.mxu0 0
        %438 = vmatmul.mubr.bf16.gmra.mxu0 %v375
        %v439 = vpop.f32.mrf.mxu0
        %v440 = vadd.f32 %v263, %v439
        %v441 = vpop.f32.mrf.mxu0
        %v442 = vadd.f32 %v263, %v441
        %v443 = vpop.f32.mrf.mxu0
        %v444 = vadd.f32 %v268, %v443
        %v445 = vpop.f32.mrf.mxu0
        %v446 = vadd.f32 %v268, %v445
        %447 = vmatprep.mubr.bf16.mxu0 0
        %448 = vmatmul.mubr.bf16.gmra.mxu0 %v378
        %v449 = vpop.f32.mrf.mxu0
        %v450 = vadd.f32 %v273, %v449
        %v451 = vpop.f32.mrf.mxu0
        %v452 = vadd.f32 %v273, %v451
        %v453 = vpop.f32.mrf.mxu0
        %v454 = vadd.f32 %v278, %v453
        %v455 = vpop.f32.mrf.mxu0
        %v456 = vadd.f32 %v278, %v455
        %457 = vmatprep.mubr.bf16.mxu0 0
        %458 = vmatmul.mubr.bf16.gmra.mxu0 %v381
        %v459 = vpop.f32.mrf.mxu0
        %v460 = vadd.f32 %v283, %v459
        %v461 = vpop.f32.mrf.mxu0
        %v462 = vadd.f32 %v283, %v461
        %v463 = vpop.f32.mrf.mxu0
        %v464 = vadd.f32 %v288, %v463
        %v465 = vpop.f32.mrf.mxu0
        %v466 = vadd.f32 %v288, %v465
        %467 = vmatprep.mubr.bf16.mxu0 0
        %468 = vmatmul.mubr.bf16.gmra.mxu0 %v384
        %v469 = vpop.f32.mrf.mxu0
        %v470 = vadd.f32 %v293, %v469
        %v471 = vpop.f32.mrf.mxu0
        %v472 = vadd.f32 %v293, %v471
        %v473 = vpop.f32.mrf.mxu0
        %v474 = vadd.f32 %v298, %v473
        %v475 = vpop.f32.mrf.mxu0
        %v476 = vadd.f32 %v298, %v475
        %477 = vmatprep.mubr.bf16.mxu0 0
        %478 = vmatmul.mubr.bf16.gmra.mxu0 %v387
        %v479 = vpop.f32.mrf.mxu0
        %v480 = vadd.f32 %v303, %v479
        %v481 = vpop.f32.mrf.mxu0
        %v482 = vadd.f32 %v303, %v481
        %v483 = vpop.f32.mrf.mxu0
        %v484 = vadd.f32 %v308, %v483
        %v485 = vpop.f32.mrf.mxu0
        %v486 = vadd.f32 %v308, %v485
        %487 = vmatprep.mubr.bf16.mxu0 0
        %488 = vmatmul.mubr.bf16.gmra.mxu0 %v390
        %v489 = vpop.f32.mrf.mxu0
        %v490 = vadd.f32 %v313, %v489
        %v491 = vpop.f32.mrf.mxu0
        %v492 = vadd.f32 %v313, %v491
        %v493 = vpop.f32.mrf.mxu0
        %v494 = vadd.f32 %v318, %v493
        %v495 = vpop.f32.mrf.mxu0
        %v496 = vadd.f32 %v318, %v495
        %497 = vmatprep.mubr.bf16.mxu0 0
        %498 = vmatmul.mubr.bf16.gmra.mxu0 %v393
        %v499 = vpop.f32.mrf.mxu0
        %v500 = vadd.f32 %v323, %v499
        %v501 = vpop.f32.mrf.mxu0
        %v502 = vadd.f32 %v323, %v501
        %v503 = vpop.f32.mrf.mxu0
        %v504 = vadd.f32 %v328, %v503
        %v505 = vpop.f32.mrf.mxu0
        %v506 = vadd.f32 %v328, %v505
        %507 = vdwg.mxu0
        %v508 = vmax.f32 %v430, 0.0
        %v509 = vmax.f32 %v432, 0.0
        %v510 = vmax.f32 %v434, 0.0
        %v511 = vmax.f32 %v436, 0.0
        %v512 = vmax.f32 %v440, 0.0
        %v513 = vmax.f32 %v442, 0.0
        %v514 = vmax.f32 %v444, 0.0
        %v515 = vmax.f32 %v446, 0.0
        %v516 = vmax.f32 %v450, 0.0
        %v517 = vmax.f32 %v452, 0.0
        %v518 = vmax.f32 %v454, 0.0
        %v519 = vmax.f32 %v456, 0.0
        %v520 = vmax.f32 %v460, 0.0
        %v521 = vmax.f32 %v462, 0.0
        %v522 = vmax.f32 %v464, 0.0
        %v523 = vmax.f32 %v466, 0.0
        %v524 = vmax.f32 %v470, 0.0
        %v525 = vmax.f32 %v472, 0.0
        %v526 = vmax.f32 %v474, 0.0
        %v527 = vmax.f32 %v476, 0.0
        %v528 = vmax.f32 %v480, 0.0
        %v529 = vmax.f32 %v482, 0.0
        %v530 = vmax.f32 %v484, 0.0
        %v531 = vmax.f32 %v486, 0.0
        %v532 = vmax.f32 %v490, 0.0
        %v533 = vmax.f32 %v492, 0.0
        %v534 = vmax.f32 %v494, 0.0
        %v535 = vmax.f32 %v496, 0.0
        %v536 = vmax.f32 %v500, 0.0
        %v537 = vmax.f32 %v502, 0.0
        %v538 = vmax.f32 %v504, 0.0
        %v539 = vmax.f32 %v506, 0.0
        %v540 = vpack.c.bf16 %v510, %v508
        %v541 = vpack.c.bf16 %v511, %v509
        %v542 = vpack.c.bf16 %v514, %v512
        %v543 = vpack.c.bf16 %v515, %v513
        %v544 = vpack.c.bf16 %v518, %v516
        %v545 = vpack.c.bf16 %v519, %v517
        %v546 = vpack.c.bf16 %v522, %v520
        %v547 = vpack.c.bf16 %v523, %v521
        %v548 = vpack.c.bf16 %v526, %v524
        %v549 = vpack.c.bf16 %v527, %v525
        %v550 = vpack.c.bf16 %v530, %v528
        %v551 = vpack.c.bf16 %v531, %v529
        %v552 = vpack.c.bf16 %v534, %v532
        %v553 = vpack.c.bf16 %v535, %v533
        %v554 = vpack.c.bf16 %v538, %v536
        %v555 = vpack.c.bf16 %v539, %v537
        %v572 = vunpack.c.l.b16 %v540
        %v573 = vunpack.c.l.b16 %v541
        %v574 = vunpack.c.h.b16 %v540
        %v575 = vunpack.c.h.b16 %v541
        %v576 = vunpack.c.l.b16 %v542
        %v577 = vunpack.c.l.b16 %v543
        %v578 = vunpack.c.h.b16 %v542
        %v579 = vunpack.c.h.b16 %v543
        %v580 = vunpack.c.l.b16 %v544
        %v581 = vunpack.c.l.b16 %v545
        %v582 = vunpack.c.h.b16 %v544
        %v583 = vunpack.c.h.b16 %v545
        %v584 = vunpack.c.l.b16 %v546
        %v585 = vunpack.c.l.b16 %v547
        %v586 = vunpack.c.h.b16 %v546
        %v587 = vunpack.c.h.b16 %v547
        %v588 = vunpack.c.l.b16 %v548
        %v589 = vunpack.c.l.b16 %v549
        %v590 = vunpack.c.h.b16 %v548
        %v591 = vunpack.c.h.b16 %v549
        %v592 = vunpack.c.l.b16 %v550
        %v593 = vunpack.c.l.b16 %v551
        %v594 = vunpack.c.h.b16 %v550
        %v595 = vunpack.c.h.b16 %v551
        %v596 = vunpack.c.l.b16 %v552
        %v597 = vunpack.c.l.b16 %v553
        %v598 = vunpack.c.h.b16 %v552
        %v599 = vunpack.c.h.b16 %v553
        %v600 = vunpack.c.l.b16 %v554
        %v601 = vunpack.c.l.b16 %v555
        %v602 = vunpack.c.h.b16 %v554
        %v603 = vunpack.c.h.b16 %v555
        %v604 = vpack.c.b16 %v573, %v572
        %v605 = vpack.c.b16 %v575, %v574
        %v606 = vpack.c.b16 %v577, %v576
        %v607 = vpack.c.b16 %v579, %v578
        %v608 = vpack.c.b16 %v581, %v580
        %v609 = vpack.c.b16 %v583, %v582
        %v610 = vpack.c.b16 %v585, %v584
        %v611 = vpack.c.b16 %v587, %v586
        %v612 = vpack.c.b16 %v589, %v588
        %v613 = vpack.c.b16 %v591, %v590
        %v614 = vpack.c.b16 %v593, %v592
        %v615 = vpack.c.b16 %v595, %v594
        %v616 = vpack.c.b16 %v597, %v596
        %v617 = vpack.c.b16 %v599, %v598
        %v618 = vpack.c.b16 %v601, %v600
        %v619 = vpack.c.b16 %v603, %v602
        %636 = vst [vmem:[%s208] sm:$0xff] %v604
        %637 = vst [vmem:[%s208 + $0x8] sm:$0xff] %v605
        %638 = vst [vmem:[%s208 + $0x10] sm:$0xff] %v606
        %639 = vst [vmem:[%s208 + $0x18] sm:$0xff] %v607
        %640 = vst [vmem:[%s208 + $0x20] sm:$0xff] %v608
        %641 = vst [vmem:[%s208 + $0x28] sm:$0xff] %v609
        %642 = vst [vmem:[%s208 + $0x30] sm:$0xff] %v610
        %643 = vst [vmem:[%s208 + $0x38] sm:$0xff] %v611
        %644 = vst [vmem:[%s208 + $0x40] sm:$0xff] %v612
        %645 = vst [vmem:[%s208 + $0x48] sm:$0xff] %v613
        %646 = vst [vmem:[%s208 + $0x50] sm:$0xff] %v614
        %647 = vst [vmem:[%s208 + $0x58] sm:$0xff] %v615
        %648 = vst [vmem:[%s208 + $0x60] sm:$0xff] %v616
        %649 = vst [vmem:[%s208 + $0x68] sm:$0xff] %v617
        %650 = vst [vmem:[%s208 + $0x70] sm:$0xff] %v618
        %651 = vst [vmem:[%s208 + $0x78] sm:$0xff] %v619
        %s652 = sand.u32 %s106, 1
        %s653 = sand.u32 %s106, 1
        %s654 = smul.addr %s653, 128
        %s655 = scalar_lea.vmem [#allocation3], %s654
        // Predicated region
        $region56: #{_lambda_.1} parent=50 // pred_check
          %p656 = pneg %p116
        $region57: #{_lambda_.1} parent=50 // pred_check_branch
          %658 = sbr.rel (%p656) target = $region59
        $region58: #{_lambda_.1} parent=50 // pred_region
          %s659 = smul.u32 2, %s19
          %s660 = smul.addr %s18, 64
          %s661 = sadd.s32 %s659, %s660
          %s662 = smul.addr %s661, 4
          %s663 = scalar_lea.vmem %s3, %s662
          // Predicated region
          $region60: #{_lambda_.1} parent=58 // pred_check
            _
          $region61: #{_lambda_.1} parent=58 // pred_check_branch
            %665 = sbr.rel (0) target = $region63
          $region62: #{_lambda_.1} parent=58 // pred_region
            // Predicated region
            $region64: #{_lambda_.1} parent=62 // pred_check
              _
            $region65: #{_lambda_.1} parent=62 // pred_check_branch
              %667 = sbr.rel (0) target = $region67
            $region66: #{_lambda_.1} parent=62 // pred_region
              // Predicated region
              $region79: #{_lambda_.1} parent=66 // pred_check
                _
              $region80: #{_lambda_.1} parent=66 // pred_check_branch
                %713 = sbr.rel (0) target = $region82
              $region81: #{_lambda_.1} parent=66 // pred_region
                loop: start=0, step=1, limit=1
                $region83: #{_lambda_.1} parent=81 // loop_pre_header
                  _
                $region84: #{_lambda_.1} parent=81 // loop_header
                  %s715 = sphi 0, %s719
                  %p716 = scmp.ge.s32.totalorder %s715, 1
                  %s720 = sphi %s655, %s655
                  %s721 = sphi %s663, %s663
                $region85: #{_lambda_.1} parent=81 // loop_header_branch
                  %718 = sbr.rel (%p716) target = $region89
                $region86: #{_lambda_.1} parent=81 // loop_body
                  %v722 = vld [vmem:[%s720] sm:$0xff]
                  %723 = vst [vmem:[%s721] sm:$0xff] %v722
                  %v724 = vld [vmem:[%s720 + $0x8] sm:$0xff]
                  %725 = vst [vmem:[%s721 + $0x10] sm:$0xff] %v724
                  %v726 = vld [vmem:[%s720 + $0x10] sm:$0xff]
                  %727 = vst [vmem:[%s721 + $0x20] sm:$0xff] %v726
                  %v728 = vld [vmem:[%s720 + $0x18] sm:$0xff]
                  %729 = vst [vmem:[%s721 + $0x30] sm:$0xff] %v728
                  %v730 = vld [vmem:[%s720 + $0x20] sm:$0xff]
                  %731 = vst [vmem:[%s721 + $0x40] sm:$0xff] %v730
                  %v732 = vld [vmem:[%s720 + $0x28] sm:$0xff]
                  %733 = vst [vmem:[%s721 + $0x50] sm:$0xff] %v732
                  %v734 = vld [vmem:[%s720 + $0x30] sm:$0xff]
                  %735 = vst [vmem:[%s721 + $0x60] sm:$0xff] %v734
                  %v736 = vld [vmem:[%s720 + $0x38] sm:$0xff]
                  %737 = vst [vmem:[%s721 + $0x70] sm:$0xff] %v736
                  %v738 = vld [vmem:[%s720 + $0x40] sm:$0xff]
                  %739 = vst [vmem:[%s721 + $0x80] sm:$0xff] %v738
                  %v740 = vld [vmem:[%s720 + $0x48] sm:$0xff]
                  %741 = vst [vmem:[%s721 + $0x90] sm:$0xff] %v740
                  %v742 = vld [vmem:[%s720 + $0x50] sm:$0xff]
                  %743 = vst [vmem:[%s721 + $0xa0] sm:$0xff] %v742
                  %v744 = vld [vmem:[%s720 + $0x58] sm:$0xff]
                  %745 = vst [vmem:[%s721 + $0xb0] sm:$0xff] %v744
                  %v746 = vld [vmem:[%s720 + $0x60] sm:$0xff]
                  %747 = vst [vmem:[%s721 + $0xc0] sm:$0xff] %v746
                  %v748 = vld [vmem:[%s720 + $0x68] sm:$0xff]
                  %749 = vst [vmem:[%s721 + $0xd0] sm:$0xff] %v748
                  %v750 = vld [vmem:[%s720 + $0x70] sm:$0xff]
                  %751 = vst [vmem:[%s721 + $0xe0] sm:$0xff] %v750
                  %v752 = vld [vmem:[%s720 + $0x78] sm:$0xff]
                  %753 = vst [vmem:[%s721 + $0xf0] sm:$0xff] %v752
                $region87: #{_lambda_.1} parent=81 // loop_footer
                  %s719 = sadd.s32 1, %s715
                $region88: #{_lambda_.1} parent=81 // loop_footer_branch
                  %714 = sbr.rel target = $region84
                $region89: #{_lambda_.1} parent=81 // loop_exit
                  _
              $region82: #{_lambda_.1} parent=66 // pred_fallthru
                _
              // Predicated region
              $region90: #{_lambda_.1} parent=66 // pred_check
                _
              $region91: #{_lambda_.1} parent=66 // pred_check_branch
                %755 = sbr.rel target = $region93
              $region92: #{_lambda_.1} parent=66 // pred_region
                _
              $region93: #{_lambda_.1} parent=66 // pred_fallthru
                _
            $region67: #{_lambda_.1} parent=62 // pred_fallthru
              _
            // Predicated region
            $region68: #{_lambda_.1} parent=62 // pred_check
              _
            $region69: #{_lambda_.1} parent=62 // pred_check_branch
              %669 = sbr.rel target = $region71
            $region70: #{_lambda_.1} parent=62 // pred_region
              %s671 = ssub.s32 256, 1
              loop: start=0, step=1, limit=1
              $region72: #{_lambda_.1} parent=70 // loop_pre_header
                _
              $region73: #{_lambda_.1} parent=70 // loop_header
                %s673 = sphi 0, %s677
                %p674 = scmp.ge.s32.totalorder %s673, 1
                %s678 = sphi %s655, %s655
                %s679 = sphi %s663, %s663
              $region74: #{_lambda_.1} parent=70 // loop_header_branch
                %676 = sbr.rel (%p674) target = $region78
              $region75: #{_lambda_.1} parent=70 // loop_body
                %v680 = vld [vmem:[%s678] sm:%s671]
                %681 = vst [vmem:[%s679] sm:%s671] %v680
                %v682 = vld [vmem:[%s678 + $0x8] sm:%s671]
                %683 = vst [vmem:[%s679 + $0x10] sm:%s671] %v682
                %v684 = vld [vmem:[%s678 + $0x10] sm:%s671]
                %685 = vst [vmem:[%s679 + $0x20] sm:%s671] %v684
                %v686 = vld [vmem:[%s678 + $0x18] sm:%s671]
                %687 = vst [vmem:[%s679 + $0x30] sm:%s671] %v686
                %v688 = vld [vmem:[%s678 + $0x20] sm:%s671]
                %689 = vst [vmem:[%s679 + $0x40] sm:%s671] %v688
                %v690 = vld [vmem:[%s678 + $0x28] sm:%s671]
                %691 = vst [vmem:[%s679 + $0x50] sm:%s671] %v690
                %v692 = vld [vmem:[%s678 + $0x30] sm:%s671]
                %693 = vst [vmem:[%s679 + $0x60] sm:%s671] %v692
                %v694 = vld [vmem:[%s678 + $0x38] sm:%s671]
                %695 = vst [vmem:[%s679 + $0x70] sm:%s671] %v694
                %v696 = vld [vmem:[%s678 + $0x40] sm:%s671]
                %697 = vst [vmem:[%s679 + $0x80] sm:%s671] %v696
                %v698 = vld [vmem:[%s678 + $0x48] sm:%s671]
                %699 = vst [vmem:[%s679 + $0x90] sm:%s671] %v698
                %v700 = vld [vmem:[%s678 + $0x50] sm:%s671]
                %701 = vst [vmem:[%s679 + $0xa0] sm:%s671] %v700
                %v702 = vld [vmem:[%s678 + $0x58] sm:%s671]
                %703 = vst [vmem:[%s679 + $0xb0] sm:%s671] %v702
                %v704 = vld [vmem:[%s678 + $0x60] sm:%s671]
                %705 = vst [vmem:[%s679 + $0xc0] sm:%s671] %v704
                %v706 = vld [vmem:[%s678 + $0x68] sm:%s671]
                %707 = vst [vmem:[%s679 + $0xd0] sm:%s671] %v706
                %v708 = vld [vmem:[%s678 + $0x70] sm:%s671]
                %709 = vst [vmem:[%s679 + $0xe0] sm:%s671] %v708
                %v710 = vld [vmem:[%s678 + $0x78] sm:%s671]
                %711 = vst [vmem:[%s679 + $0xf0] sm:%s671] %v710
              $region76: #{_lambda_.1} parent=70 // loop_footer
                %s677 = sadd.s32 1, %s673
              $region77: #{_lambda_.1} parent=70 // loop_footer_branch
                %672 = sbr.rel target = $region73
              $region78: #{_lambda_.1} parent=70 // loop_exit
                _
            $region71: #{_lambda_.1} parent=62 // pred_fallthru
              _
          $region63: #{_lambda_.1} parent=58 // pred_fallthru
            _
          %756 = vnop
        $region59: #{_lambda_.1} parent=50 // pred_fallthru
          _
      $region51: #{_lambda_.1} parent=5 // pred_fallthru
        _
      %p757 = scmp.le.s32.totalorder 2, %s9
      // Predicated region
      $region94: #{_lambda_.1} parent=5 // pred_check
        %p758 = pneg %p757
      $region95: #{_lambda_.1} parent=5 // pred_check_branch
        %760 = sbr.rel (%p758) target = $region97
      $region96: #{_lambda_.1} parent=5 // pred_region
        %s761 = ssub.s32 %s9, 2
        // Predicated region
        $region98: #{_lambda_.1} parent=96 // pred_check
          %p762 = pneg %p122
        $region99: #{_lambda_.1} parent=96 // pred_check_branch
          %764 = sbr.rel (%p762) target = $region101
        $region100: #{_lambda_.1} parent=96 // pred_region
          %s765 = sand.u32 %s107, 1
          %s766 = sand.u32 %s107, 1
          %s767 = smul.addr %s766, 128
          %s768 = scalar_lea.vmem [#allocation3], %s767
        $region101: #{_lambda_.1} parent=96 // pred_fallthru
          _
      $region97: #{_lambda_.1} parent=5 // pred_fallthru
        _
    $region6: #{_lambda_.1} parent=1 // loop_footer
      %s13 = sadd.s32 1, %s9
    $region7: #{_lambda_.1} parent=1 // loop_footer_branch
      %8 = sbr.rel target = $region3
    $region8: #{_lambda_.1} parent=1 // loop_exit
      _

</llo_original>
